<compile_context>
chip_gen: v6e
topology: v6e:2x2x1
jax: 0.10.0
libtpu: 0.0.40
codegen_flags: <defaults>
</compile_context>

<pallas_src>
import jax
import jax.numpy as jnp
from jax.experimental import pallas as pl
from jax.experimental.pallas import tpu as pltpu


def _basicnn_kernel(params_ref, x_ref, o_ref):
    # params_ref: SMEM (7,) f32 -> [w00, b00, w01, w10, b10, w11, final_bias]
    w00 = params_ref[0]
    b00 = params_ref[1]
    w01 = params_ref[2]
    w10 = params_ref[3]
    b10 = params_ref[4]
    w11 = params_ref[5]
    final_bias = params_ref[6]

    x = x_ref[...].astype(jnp.float32)

    top = jnp.maximum(x * w00 + b00, 0.0) * w01
    bot = jnp.maximum(x * w10 + b10, 0.0) * w11
    # single wide unmasked store per tile; explicit cast back to output dtype
    o_ref[...] = jnp.maximum(top + bot + final_bias, 0.0).astype(o_ref.dtype)


_LANE_CHOICES = (4096, 2048, 1024, 512, 256, 128)


def _pick_lanes(n):
    """Largest lane width (multiple of 128) that divides n; prefer >=8 rows."""
    for lanes in _LANE_CHOICES:
        if n % lanes == 0 and n // lanes >= 8:
            return lanes, False
    for lanes in _LANE_CHOICES:
        if n % lanes == 0:
            return lanes, False
    return 128, True  # no clean divisor -> lane-remainder pad needed


def _vmem_limit_bytes():
    """Generation-aware scoped-VMEM budget (v5e/v6e: 128 MiB phys, v7x: 64 MiB)."""
    try:
        phys = int(pltpu.get_tpu_info().vmem_capacity_bytes)
    except Exception:
        phys = 64 << 20  # conservative (v7x per-TC) fallback
    return max(16 << 20, min(phys - (16 << 20), 48 << 20))


def basicnn_train_forward(x, params):
    """Elementwise BasicNN_train forward.

    x:      array of any shape (f32 preferred; other dtypes computed in f32).
    params: (7,) = [w00, b00, w01, w10, b10, w11, final_bias].
    """
    orig_shape = x.shape
    dtype = x.dtype
    itemsize = jnp.dtype(dtype).itemsize
    n = x.size
    if n == 0:
        return x

    flat = x.reshape(-1)

    lanes, need_pad = _pick_lanes(n)
    rows = pl.cdiv(n, lanes)
    if need_pad:
        # Only for sizes with no 128-multiple divisor; this is the one case
        # where an extra pad pass + trailing slice is unavoidable.
        flat = jnp.pad(flat, (0, rows * lanes - n))
    slab = flat.reshape(rows, lanes)

    vmem_limit = _vmem_limit_bytes()
    target_tile_bytes = vmem_limit // 6  # 2 in + 2 out buffers + 50% headroom

    # dtype-aware sublane granularity (f32: 8, bf16: 16, int8/fp8: 32)
    sublane = {4: 8, 2: 16, 1: 32}.get(itemsize, 8)
    tile_rows_cap = max(
        sublane, (target_tile_bytes // (lanes * itemsize)) // sublane * sublane
    )
    if rows <= tile_rows_cap:
        # Single row-block == full array dim: no (8,128) constraint, no padding.
        tile_rows = rows
    else:
        tile_rows = tile_rows_cap

    grid = (pl.cdiv(rows, tile_rows),)  # ragged last block handled by Pallas

    out = pl.pallas_call(
        _basicnn_kernel,
        out_shape=jax.ShapeDtypeStruct((rows, lanes), dtype),
        grid=grid,
        in_specs=[
            pl.BlockSpec(memory_space=pltpu.SMEM),               # params (SMEM)
            pl.BlockSpec((tile_rows, lanes), lambda i: (i, 0)),  # input row-tile
        ],
        out_specs=pl.BlockSpec((tile_rows, lanes), lambda i: (i, 0)),
        compiler_params=pltpu.CompilerParams(
            # "parallel" lets v7x shard row-tiles across both TensorCores;
            # harmless single-TC loop on v5e/v6e.
            dimension_semantics=("parallel",),
            vmem_limit_bytes=vmem_limit,
        ),
    )(params.astype(jnp.float32), slab)

    flat_out = out.reshape(-1)
    if need_pad:
        flat_out = flat_out[:n]
    return flat_out.reshape(orig_shape)


def _reference(x, params):
    w00, b00, w01, w10, b10, w11, fb = [params[i] for i in range(7)]
    top = jnp.maximum(x * w00 + b00, 0.0) * w01
    bot = jnp.maximum(x * w10 + b10, 0.0) * w11
    return jnp.maximum(top + bot + fb, 0.0)


if __name__ == "__main__":
    # Deterministic parameters, exactly as in BasicNN_train.__init__
    # (final_bias starts at 0.0 before training).
    # TODO(synk): the SGD training loop / autograd on final_bias is host-side
    # PyTorch machinery; only the forward pass is implemented as a kernel.
    params = jnp.array([1.7, -0.85, -40.8, 12.6, 0.0, 2.7, 0.0], dtype=jnp.float32)

    key = jax.random.PRNGKey(0)
    k0, k1, k2 = jax.random.split(key, 3)

    # Small 2-D input (doses in [0,1]): aligned path, zero pad / zero slice.
    x_small = jax.random.uniform(k0, (8, 128), dtype=jnp.float32)
    out_small = jax.block_until_ready(basicnn_train_forward(x_small, params))
    ref_small = _reference(x_small, params)
    assert out_small.shape == x_small.shape and out_small.dtype == x_small.dtype
    assert jnp.allclose(out_small, ref_small, atol=1e-5, rtol=1e-5)

    # Ragged 1-D input: exercises the lane-remainder pad / slice fallback.
    x_ragged = jax.random.uniform(k1, (1000,), dtype=jnp.float32)
    out_ragged = jax.block_until_ready(basicnn_train_forward(x_ragged, params))
    ref_ragged = _reference(x_ragged, params)
    assert out_ragged.shape == x_ragged.shape and out_ragged.dtype == x_ragged.dtype
    assert jnp.allclose(out_ragged, ref_ragged, atol=1e-5, rtol=1e-5)

    # 4-D batch-like input (aligned, multi-row slab).
    x_4d = jax.random.uniform(k2, (2, 4, 16, 16), dtype=jnp.float32)
    out_4d = jax.block_until_ready(basicnn_train_forward(x_4d, params))
    ref_4d = _reference(x_4d, params)
    assert out_4d.shape == x_4d.shape and out_4d.dtype == x_4d.dtype
    assert jnp.allclose(out_4d, ref_4d, atol=1e-5, rtol=1e-5)

    print("KERNEL_OK")
</pallas_src>

<mosaic_0001>
module attributes {stable_mosaic.version = 11 : i64} {
  func.func @_basicnn_kernel(%arg0: i32, %arg1: memref<7xf32, #tpu.memory_space<smem>>, %arg2: memref<8x128xf32, #tpu.memory_space<vmem>>, %arg3: memref<8x128xf32, #tpu.memory_space<vmem>>) attributes {dimension_semantics = [#tpu.dimension_semantics<parallel>], iteration_bounds = array<i64: 1>, scalar_prefetch = 0 : i64, scratch_operands = 0 : i64, tpu.core_type = #tpu.core_type<tc>, window_params = [{transform_indices = @transform_0, window_bounds = array<i64: 7>}, {transform_indices = @transform_1, window_bounds = array<i64: 8, 128>}, {transform_indices = @transform_2, window_bounds = array<i64: 8, 128>}]} {
    %c0 = arith.constant 0 : index
    %0 = memref.load %arg1[%c0] : memref<7xf32, #tpu.memory_space<smem>>
    %c1 = arith.constant 1 : index
    %1 = memref.load %arg1[%c1] : memref<7xf32, #tpu.memory_space<smem>>
    %c2 = arith.constant 2 : index
    %2 = memref.load %arg1[%c2] : memref<7xf32, #tpu.memory_space<smem>>
    %c3 = arith.constant 3 : index
    %3 = memref.load %arg1[%c3] : memref<7xf32, #tpu.memory_space<smem>>
    %c4 = arith.constant 4 : index
    %4 = memref.load %arg1[%c4] : memref<7xf32, #tpu.memory_space<smem>>
    %c5 = arith.constant 5 : index
    %5 = memref.load %arg1[%c5] : memref<7xf32, #tpu.memory_space<smem>>
    %c6 = arith.constant 6 : index
    %6 = memref.load %arg1[%c6] : memref<7xf32, #tpu.memory_space<smem>>
    %c0_0 = arith.constant 0 : index
    %c0_1 = arith.constant 0 : index
    %7 = vector.load %arg2[%c0_0, %c0_1] : memref<8x128xf32, #tpu.memory_space<vmem>>, vector<8x128xf32>
    %8 = vector.broadcast %0 : f32 to vector<8x128xf32>
    %9 = arith.mulf %7, %8 : vector<8x128xf32>
    %10 = vector.broadcast %1 : f32 to vector<8x128xf32>
    %11 = arith.addf %9, %10 : vector<8x128xf32>
    %cst = arith.constant 0.000000e+00 : f32
    %12 = vector.broadcast %cst : f32 to vector<8x128xf32>
    %13 = arith.maximumf %11, %12 : vector<8x128xf32>
    %14 = vector.broadcast %2 : f32 to vector<8x128xf32>
    %15 = arith.mulf %13, %14 : vector<8x128xf32>
    %16 = vector.broadcast %3 : f32 to vector<8x128xf32>
    %17 = arith.mulf %7, %16 : vector<8x128xf32>
    %18 = vector.broadcast %4 : f32 to vector<8x128xf32>
    %19 = arith.addf %17, %18 : vector<8x128xf32>
    %cst_2 = arith.constant 0.000000e+00 : f32
    %20 = vector.broadcast %cst_2 : f32 to vector<8x128xf32>
    %21 = arith.maximumf %19, %20 : vector<8x128xf32>
    %22 = vector.broadcast %5 : f32 to vector<8x128xf32>
    %23 = arith.mulf %21, %22 : vector<8x128xf32>
    %24 = arith.addf %15, %23 : vector<8x128xf32>
    %25 = vector.broadcast %6 : f32 to vector<8x128xf32>
    %26 = arith.addf %24, %25 : vector<8x128xf32>
    %cst_3 = arith.constant 0.000000e+00 : f32
    %27 = vector.broadcast %cst_3 : f32 to vector<8x128xf32>
    %28 = arith.maximumf %26, %27 : vector<8x128xf32>
    %c0_4 = arith.constant 0 : index
    %c0_5 = arith.constant 0 : index
    %29 = vector.load %arg3[%c0_4, %c0_5] : memref<8x128xf32, #tpu.memory_space<vmem>>, vector<8x128xf32>
    tpu.vector_store %arg3[%c0_4, %c0_5], %28 {strides = array<i32>} : memref<8x128xf32, #tpu.memory_space<vmem>>, vector<8x128xf32>,
    return
  }
  func.func @transform_0(%arg0: i32) -> i32 {
    %c0_i32 = arith.constant 0 : i32
    %c0_i32_0 = arith.constant 0 : i32
    return %c0_i32 : i32
  }
  func.func @transform_1(%arg0: i32) -> (i32, i32) {
    %c0_i32 = arith.constant 0 : i32
    %c0_i32_0 = arith.constant 0 : i32
    return %arg0, %c0_i32 : i32, i32
  }
  func.func @transform_2(%arg0: i32) -> (i32, i32) {
    %c0_i32 = arith.constant 0 : i32
    %c0_i32_0 = arith.constant 0 : i32
    return %arg0, %c0_i32 : i32, i32
  }
}

</mosaic_0001>

<llo_original>
// kernel: tpu_custom_call.1
$region0: #{tpu_custom_call.1}
  #allocation0 [shape = 'u32[]', space=smem, size = 0x4, offset = 0x4, fixed_abs, tag = 'smem constant byte address 0x4 - core index']
  #allocation1 [shape = 'u32[144,128]{1,0:T(1,128)}', space=vmem, size = 0x12000, scoped, tag = 'internal scratch']
  %s0 = inlined_call_operand.hbm [shape: f32[7], index: 0, kind: input, shape index: {}]
  %s1 = inlined_call_operand.hbm [shape: f32[8,128], index: 1, kind: input, shape index: {}]
  %s2 = inlined_call_operand.hbm [shape: f32[8,128], index: 2, kind: output, shape index: {}]
  %s3 = sld [smem:[#allocation0]]
  $region26: #{tpu_custom_call.1} parent=0
    _
  %s5 = ssub.s32 1, %s3
  %s6 = scalar_select 0, %s5, %s3
  $region1: #{tpu_custom_call.1} parent=0
    #allocation2 [shape = 'u8[512]{0}', space=smem, size = 0x200, scoped, tag = 'input window, operand 0, single buffered']
    #allocation3 [shape = 's32[1]{0}', space=sflag, size = 0x4, scoped, tag = 'scoped memory for tpu_custom_call.1']
    #allocation4 [shape = 's32[1]{0}', space=sflag, size = 0x4, scoped, tag = 'scoped memory for tpu_custom_call.1']
    #allocation5 [shape = 's32[1]{0}', space=sflag, size = 0x4, scoped, tag = 'scoped memory for tpu_custom_call.1']
    #allocation6 [shape = 'u8[4096]{0}', space=vmem, size = 0x1000, scoped, tag = 'input window, operand 1, single buffered']
    #allocation7 [shape = 'u8[4096]{0}', space=vmem, size = 0x1000, scoped, tag = 'output window, operand 0, single buffered']
    %7 = vsyncpa [#allocation5], 0
    %8 = vsyncpa [#allocation3], 0
    %9 = vsyncpa [#allocation4], 0
    // Predicated region
    $region2: #{tpu_custom_call.1} parent=1 // pred_check
      _
    $region3: #{tpu_custom_call.1} parent=1 // pred_check_branch
      %11 = sbr.rel (0) target = $region5
    $region4: #{tpu_custom_call.1} parent=1 // pred_region
      %s13 = ssub.s32 16, 16
      %14 = vsyncadd [#allocation5], %s13
      %17 = dma.hbm_to_smem %s0, 16, [#allocation2], [#allocation5]
    $region5: #{tpu_custom_call.1} parent=1 // pred_fallthru
      _
    // Predicated region
    $region6: #{tpu_custom_call.1} parent=1 // pred_check
      _
    $region7: #{tpu_custom_call.1} parent=1 // pred_check_branch
      %19 = sbr.rel (0) target = $region9
    $region8: #{tpu_custom_call.1} parent=1 // pred_region
      %s21 = ssub.s32 128, 128
      %22 = vsyncadd [#allocation3], %s21
      %s24 = sshll.u32 [#allocation6], 4
      %s25 = int_to_ptr.vmem [resolvable:$true] %s24
      %27 = dma.hbm_to_vmem [thread:$0]  %s1, 128, %s25, [#allocation3]
    $region9: #{tpu_custom_call.1} parent=1 // pred_fallthru
      _
    // Predicated region
    $region10: #{tpu_custom_call.1} parent=1 // pred_check
      _
    $region11: #{tpu_custom_call.1} parent=1 // pred_check_branch
      %29 = sbr.rel (0) target = $region13
    $region12: #{tpu_custom_call.1} parent=1 // pred_region
      %30 = dma.done [#allocation5], 16
    $region13: #{tpu_custom_call.1} parent=1 // pred_fallthru
      _
    // Predicated region
    $region14: #{tpu_custom_call.1} parent=1 // pred_check
      _
    $region15: #{tpu_custom_call.1} parent=1 // pred_check_branch
      %32 = sbr.rel (0) target = $region17
    $region16: #{tpu_custom_call.1} parent=1 // pred_region
      %33 = dma.done [#allocation3], 128
    $region17: #{tpu_custom_call.1} parent=1 // pred_fallthru
      _
    %34 = sfence
    %s35 = sld [smem:[#allocation2]]
    %s36 = sld [smem:[#allocation2 + $0x1]]
    %s37 = sld [smem:[#allocation2 + $0x2]]
    %s38 = sld [smem:[#allocation2 + $0x3]]
    %s39 = sld [smem:[#allocation2 + $0x4]]
    %s40 = sld [smem:[#allocation2 + $0x5]]
    %s41 = sld [smem:[#allocation2 + $0x6]]
    %v42 = vld [vmem:[#allocation6] sm:$0xff]
    %v43 = vstv %s35
    %v44 = vmul.f32 %v42, %v43
    %v45 = vstv %s36
    %v46 = vadd.f32 %v44, %v45
    %v47 = vmax.f32 %v46, 0.0
    %v48 = vstv %s37
    %v49 = vmul.f32 %v47, %v48
    %v50 = vstv %s38
    %v51 = vmul.f32 %v42, %v50
    %v52 = vstv %s39
    %v53 = vadd.f32 %v51, %v52
    %v54 = vmax.f32 %v53, 0.0
    %v55 = vstv %s40
    %v56 = vmul.f32 %v54, %v55
    %v57 = vadd.f32 %v49, %v56
    %v58 = vstv %s41
    %v59 = vadd.f32 %v57, %v58
    %v60 = vmax.f32 %v59, 0.0
    %61 = vst [vmem:[#allocation7] sm:$0xff] %v60
    // Predicated region
    $region18: #{tpu_custom_call.1} parent=1 // pred_check
      _
    $region19: #{tpu_custom_call.1} parent=1 // pred_check_branch
      %63 = sbr.rel (0) target = $region21
    $region20: #{tpu_custom_call.1} parent=1 // pred_region
      %s65 = ssub.s32 128, 128
      %66 = vsyncadd [#allocation4], %s65
      %s68 = sshll.u32 [#allocation7], 4
      %s69 = int_to_ptr.vmem [resolvable:$true] %s68
      %71 = dma.vmem_to_hbm [thread:$0]  %s69, 128, %s2, [#allocation4]
    $region21: #{tpu_custom_call.1} parent=1 // pred_fallthru
      _
    // Predicated region
    $region22: #{tpu_custom_call.1} parent=1 // pred_check
      _
    $region23: #{tpu_custom_call.1} parent=1 // pred_check_branch
      %73 = sbr.rel (0) target = $region25
    $region24: #{tpu_custom_call.1} parent=1 // pred_region
      %74 = dma.done [#allocation4], 128
    $region25: #{tpu_custom_call.1} parent=1 // pred_fallthru
      _
    %75 = vsyncpa [#allocation3], 1
    %76 = vsyncpa [#allocation4], 1
    %77 = vsyncpa [#allocation5], 1

</llo_original>
